<compile_context>
chip_gen: v6e
topology: v6e:2x2x1
jax: 0.10.0
libtpu: 0.0.40
codegen_flags: <defaults>
</compile_context>

<pallas_src>
import jax
import jax.numpy as jnp
from jax import lax
from jax.experimental import pallas as pl
from jax.experimental.pallas import tpu as pltpu


def _round_up(n, m):
    return ((n + m - 1) // m) * m


def _mini_fc_resblock_kernel(x_ref, v_ref, p_ref, o_ref):
    x = x_ref[...]                      # (TB, Fp)  batch tile
    v = v_ref[...]                      # (Fp, Fp)  weight-norm direction, (in, out) layout
    p = p_ref[...]                      # (8,  Fp)  packed per-feature params

    g  = p[0:1, :]                      # weight-norm magnitude (per output feature)
    b  = p[1:2, :]                      # linear bias
    pa = p[2:3, :]                      # PReLU per-feature slope
    aa = p[3:4, :]                      # WNAdd scale on identity path (init 1)
    ab = p[4:5, :]                      # WNAdd scale on residue  path (init 0)

    # --- weight norm scale per output column: s[j] = g[j] / ||v[:, j]||  (rsqrt -> EUP) ---
    inv_norm = lax.rsqrt(jnp.sum(v * v, axis=0, keepdims=True))   # (1, Fp)
    s = g * inv_norm                                              # (1, Fp)

    # --- linear: contracting dim of RHS is leading -> feeds MXU without a transpose.
    #     W = v * s (per column), so x @ W == (x @ v) * s: scale applied post-matmul.
    y = jnp.dot(x, v, preferred_element_type=jnp.float32) * s + b  # (TB, Fp)

    # --- per-feature PReLU ---
    h = jnp.where(y > 0, y, pa * y)

    # --- WNAdd(num_features, 1, 0) ---
    o_ref[...] = aa * x + ab * h


def mini_fc_resblock(x, v, g, b, prelu_a, add_a, add_b, *, block_b=None):
    """x: (B, F); v: (F, F) with rows = output features (torch Linear layout);
    g: (F, 1); b / prelu_a / add_a / add_b: (1, F)."""
    B, F = x.shape
    Fp = _round_up(F, 128)                       # lane-dense feature dim

    if block_b is None:
        block_b = min(_round_up(B, 8), 512)      # biggest tile that comfortably fits VMEM
    block_b = _round_up(block_b, 8)
    B_pad = _round_up(B, block_b)

    f32 = jnp.float32

    # --- layout plumbing (all wrapper-side, outside the kernel) ---
    x_p = jnp.zeros((B_pad, Fp), f32).at[:B, :F].set(x.astype(f32))

    # v stored transposed: (F_in, F_out); norm is then per column == torch's per
    # output row.  Padded output columns get a unit entry so rsqrt stays finite;
    # their g is 0, so those effective weight columns are exactly zero.
    v_tp = jnp.zeros((Fp, Fp), f32).at[:F, :F].set(v.astype(f32).T)
    if Fp > F:
        pad_idx = jnp.arange(F, Fp)
        v_tp = v_tp.at[pad_idx, pad_idx].set(1.0)

    params = jnp.zeros((8, Fp), f32)
    params = params.at[0, :F].set(g.astype(f32).reshape(-1))
    params = params.at[1, :F].set(b.astype(f32).reshape(-1))
    params = params.at[2, :F].set(prelu_a.astype(f32).reshape(-1))
    params = params.at[3, :F].set(add_a.astype(f32).reshape(-1))
    params = params.at[4, :F].set(add_b.astype(f32).reshape(-1))

    grid = (B_pad // block_b,)

    out_p = pl.pallas_call(
        _mini_fc_resblock_kernel,
        out_shape=jax.ShapeDtypeStruct((B_pad, Fp), f32),
        grid=grid,
        in_specs=[
            pl.BlockSpec((block_b, Fp), lambda i: (i, 0)),   # x: tiled over batch
            pl.BlockSpec((Fp, Fp), lambda i: (0, 0)),        # v: resident
            pl.BlockSpec((8, Fp), lambda i: (0, 0)),         # packed params: resident
        ],
        out_specs=pl.BlockSpec((block_b, Fp), lambda i: (i, 0)),
        compiler_params=pltpu.CompilerParams(
            dimension_semantics=("parallel",)),              # batch axis -> both TCs on v7x
    )(x_p, v_tp, params)

    return out_p[:B, :F]


def _reference(x, v, g, b, prelu_a, add_a, add_b):
    vnorm = jnp.sqrt(jnp.sum(v * v, axis=1, keepdims=True))
    w = v * (g / vnorm)
    y = x @ w.T + b
    h = jnp.where(y > 0, y, prelu_a * y)
    return add_a * x + add_b * h


if __name__ == "__main__":
    B, F = 16, 32  # batch, num_features (small, per module spec)

    key = jax.random.PRNGKey(0)
    kx, kv, kb = jax.random.split(key, 3)

    x = jax.random.normal(kx, (B, F), dtype=jnp.float32)

    # WNLinear params: direction v, magnitude g (init so initial W == v, matching
    # torch.nn.utils.weight_norm initialization), bias b.
    v = 0.1 * jax.random.normal(kv, (F, F), dtype=jnp.float32)
    g = jnp.sqrt(jnp.sum(v * v, axis=1, keepdims=True))            # (F, 1)
    b = 0.01 * jax.random.normal(kb, (1, F), dtype=jnp.float32)     # (1, F)

    # WNPReLU: per-feature slope, PyTorch PReLU default init 0.25.
    prelu_a = jnp.full((1, F), 0.25, dtype=jnp.float32)

    # WNAdd(num_features, 1, 0): per-feature scales, init 1 (identity) and 0 (residue).
    add_a = jnp.ones((1, F), dtype=jnp.float32)
    add_b = jnp.zeros((1, F), dtype=jnp.float32)

    # block_b=8 exercises the multi-tile batch grid (grid=(2,)) at this small size.
    out = mini_fc_resblock(x, v, g, b, prelu_a, add_a, add_b, block_b=8)
    out = jax.block_until_ready(out)

    ref = _reference(x, v, g, b, prelu_a, add_a, add_b)
    assert out.shape == (B, F)
    assert jnp.allclose(out, ref, atol=1e-5, rtol=1e-5)

    print("KERNEL_OK")
</pallas_src>

<mosaic_0001>
module attributes {stable_mosaic.version = 11 : i64} {
  func.func @_mini_fc_resblock_kernel(%arg0: i32, %arg1: memref<8x128xf32, #tpu.memory_space<vmem>>, %arg2: memref<128x128xf32, #tpu.memory_space<vmem>>, %arg3: memref<8x128xf32, #tpu.memory_space<vmem>>, %arg4: memref<8x128xf32, #tpu.memory_space<vmem>>) attributes {dimension_semantics = [#tpu.dimension_semantics<parallel>], iteration_bounds = array<i64: 2>, scalar_prefetch = 0 : i64, scratch_operands = 0 : i64, tpu.core_type = #tpu.core_type<tc>, window_params = [{transform_indices = @transform_0, window_bounds = array<i64: 8, 128>}, {pipeline_mode = #tpu.pipeline_mode<synchronous>, transform_indices = @transform_1, window_bounds = array<i64: 128, 128>}, {pipeline_mode = #tpu.pipeline_mode<synchronous>, transform_indices = @transform_2, window_bounds = array<i64: 8, 128>}, {transform_indices = @transform_3, window_bounds = array<i64: 8, 128>}]} {
    %c0 = arith.constant 0 : index
    %c0_0 = arith.constant 0 : index
    %0 = vector.load %arg1[%c0, %c0_0] : memref<8x128xf32, #tpu.memory_space<vmem>>, vector<8x128xf32>
    %c0_1 = arith.constant 0 : index
    %c0_2 = arith.constant 0 : index
    %1 = vector.load %arg2[%c0_1, %c0_2] : memref<128x128xf32, #tpu.memory_space<vmem>>, vector<128x128xf32>
    %c0_3 = arith.constant 0 : index
    %c0_4 = arith.constant 0 : index
    %2 = vector.load %arg3[%c0_3, %c0_4] : memref<8x128xf32, #tpu.memory_space<vmem>>, vector<8x128xf32>
    %3 = vector.extract_strided_slice %2 {offsets = [0, 0], sizes = [1, 128], strides = [1, 1]} : vector<8x128xf32> to vector<1x128xf32>
    %4 = vector.extract_strided_slice %2 {offsets = [1, 0], sizes = [1, 128], strides = [1, 1]} : vector<8x128xf32> to vector<1x128xf32>
    %5 = vector.extract_strided_slice %2 {offsets = [2, 0], sizes = [1, 128], strides = [1, 1]} : vector<8x128xf32> to vector<1x128xf32>
    %6 = vector.extract_strided_slice %2 {offsets = [3, 0], sizes = [1, 128], strides = [1, 1]} : vector<8x128xf32> to vector<1x128xf32>
    %7 = vector.extract_strided_slice %2 {offsets = [4, 0], sizes = [1, 128], strides = [1, 1]} : vector<8x128xf32> to vector<1x128xf32>
    %8 = arith.mulf %1, %1 : vector<128x128xf32>
    %cst = arith.constant dense<0.000000e+00> : vector<128xf32>
    %9 = vector.multi_reduction <add>, %8, %cst [0] : vector<128x128xf32> to vector<128xf32>
    %10 = vector.shape_cast %9 : vector<128xf32> to vector<1x128xf32>
    %11 = math.rsqrt %10 : vector<1x128xf32>
    %12 = arith.mulf %3, %11 : vector<1x128xf32>
    %cst_5 = arith.constant dense<0.000000e+00> : vector<8x128xf32>
    %13 = tpu.matmul %0, %1, %cst_5 {dimension_numbers = #tpu.dot_dimension_numbers<[1], [0], [0], [1], [0, 0, 1, 1], [], []>} : vector<8x128xf32>, vector<128x128xf32>, vector<8x128xf32> -> vector<8x128xf32>
    %14 = vector.broadcast %12 : vector<1x128xf32> to vector<8x128xf32>
    %15 = arith.mulf %13, %14 : vector<8x128xf32>
    %16 = vector.broadcast %4 : vector<1x128xf32> to vector<8x128xf32>
    %17 = arith.addf %15, %16 : vector<8x128xf32>
    %cst_6 = arith.constant 0.000000e+00 : f32
    %18 = vector.broadcast %cst_6 : f32 to vector<8x128xf32>
    %19 = arith.cmpf ogt, %17, %18 : vector<8x128xf32>
    %20 = vector.broadcast %5 : vector<1x128xf32> to vector<8x128xf32>
    %21 = arith.mulf %20, %17 : vector<8x128xf32>
    %22 = arith.select %19, %17, %21 : vector<8x128xi1>, vector<8x128xf32>
    %23 = vector.broadcast %6 : vector<1x128xf32> to vector<8x128xf32>
    %24 = arith.mulf %23, %0 : vector<8x128xf32>
    %25 = vector.broadcast %7 : vector<1x128xf32> to vector<8x128xf32>
    %26 = arith.mulf %25, %22 : vector<8x128xf32>
    %27 = arith.addf %24, %26 : vector<8x128xf32>
    %c0_7 = arith.constant 0 : index
    %c0_8 = arith.constant 0 : index
    %28 = vector.load %arg4[%c0_7, %c0_8] : memref<8x128xf32, #tpu.memory_space<vmem>>, vector<8x128xf32>
    tpu.vector_store %arg4[%c0_7, %c0_8], %27 {strides = array<i32>} : memref<8x128xf32, #tpu.memory_space<vmem>>, vector<8x128xf32>,
    return
  }
  func.func @transform_0(%arg0: i32) -> (i32, i32) {
    %c0_i32 = arith.constant 0 : i32
    %c0_i32_0 = arith.constant 0 : i32
    return %arg0, %c0_i32 : i32, i32
  }
  func.func @transform_1(%arg0: i32) -> (i32, i32) {
    %c0_i32 = arith.constant 0 : i32
    %c0_i32_0 = arith.constant 0 : i32
    %c0_i32_1 = arith.constant 0 : i32
    return %c0_i32, %c0_i32_0 : i32, i32
  }
  func.func @transform_2(%arg0: i32) -> (i32, i32) {
    %c0_i32 = arith.constant 0 : i32
    %c0_i32_0 = arith.constant 0 : i32
    %c0_i32_1 = arith.constant 0 : i32
    return %c0_i32, %c0_i32_0 : i32, i32
  }
  func.func @transform_3(%arg0: i32) -> (i32, i32) {
    %c0_i32 = arith.constant 0 : i32
    %c0_i32_0 = arith.constant 0 : i32
    return %arg0, %c0_i32 : i32, i32
  }
}

</mosaic_0001>

<llo_original>
// kernel: tpu_custom_call.1
$region0: #{tpu_custom_call.1}
  #allocation0 [shape = 'u32[]', space=smem, size = 0x4, offset = 0x4, fixed_abs, tag = 'smem constant byte address 0x4 - core index']
  #allocation1 [shape = 'u32[144,128]{1,0:T(1,128)}', space=vmem, size = 0x12000, scoped, tag = 'internal scratch']
  %s0 = inlined_call_operand.hbm [shape: f32[16,128], index: 0, kind: input, shape index: {}]
  %s1 = inlined_call_operand.hbm [shape: f32[128,128], index: 1, kind: input, shape index: {}]
  %s2 = inlined_call_operand.hbm [shape: f32[8,128], index: 2, kind: input, shape index: {}]
  %s3 = inlined_call_operand.hbm [shape: f32[16,128], index: 3, kind: output, shape index: {}]
  %s4 = sld [smem:[#allocation0]]
  $region57: #{tpu_custom_call.1} parent=0
    _
  %s6 = ssub.s32 1, %s4
  %s7 = scalar_select 0, %s6, %s4
  $region1: #{tpu_custom_call.1} parent=0
    #allocation2 [shape = 'u8[8192]{0}', space=vmem, size = 0x2000, scoped, tag = 'input window, operand 0']
    #allocation3 [shape = 's32[2]{0}', space=sflag, size = 0x8, scoped, tag = 'scoped memory for tpu_custom_call.1']
    #allocation4 [shape = 's32[2]{0}', space=sflag, size = 0x8, scoped, tag = 'scoped memory for tpu_custom_call.1']
    #allocation5 [shape = 'u8[65536]{0}', space=vmem, size = 0x10000, scoped, tag = 'input window, operand 1, single buffered']
    #allocation6 [shape = 's32[1]{0}', space=sflag, size = 0x4, scoped, tag = 'scoped memory for tpu_custom_call.1']
    #allocation7 [shape = 'u8[4096]{0}', space=vmem, size = 0x1000, scoped, tag = 'input window, operand 2, single buffered']
    #allocation8 [shape = 'u8[8192]{0}', space=vmem, size = 0x2000, scoped, tag = 'output window, operand 0']
    %8 = vsyncpa [#allocation3], 0
    %s9 = scalar_lea.sflag [#allocation3], 1
    %10 = vsyncpa %s9, 0
    %11 = vsyncpa [#allocation6], 0
    %12 = vsyncpa [#allocation4], 0
    %s13 = scalar_lea.sflag [#allocation4], 1
    %14 = vsyncpa %s13, 0
    loop: start=0, step=1, limit=4
    $region2: #{tpu_custom_call.1} parent=1 // loop_pre_header
      _
    $region3: #{tpu_custom_call.1} parent=1 // loop_header
      %s16 = sphi 0, %s20
      %p17 = scmp.ge.s32.totalorder %s16, 4
      %s26 = sphi 0, %s28
      %s29 = sphi 0, %s26
      %s30 = sphi 0, %s29
      %s46 = sphi 0, %s30
      %s50 = sphi 0, %s50
      %s52 = sphi 0, %s50
      %s53 = sphi 0, %s52
      %s67 = sphi 0, %s53
      %s71 = sphi 0, %s71
      %s73 = sphi 0, %s71
      %s74 = sphi 0, %s73
      %s88 = sphi 0, %s74
      %s94 = sphi 0, %s96
      %s97 = sphi 0, %s94
      %s98 = sphi 0, %s97
      %s114 = sphi 0, %s98
    $region4: #{tpu_custom_call.1} parent=1 // loop_header_branch
      %19 = sbr.rel (%p17) target = $region8
    $region5: #{tpu_custom_call.1} parent=1 // loop_body
      %s21 = ssub.s32 %s16, 1
      %s22 = ssub.s32 %s16, 2
      %s23 = sadd.s32 %s16, 1
      %s24 = ssub.s32 %s16, %s23
      %p25 = scmp.eq.s32.totalorder %s24, 0
      %s27 = sadd.s32 %s26, 1
      %s28 = scalar_select %p25, %s26, %s27
      %p31 = pneg %p25
      %p32 = scmp.eq.s32.totalorder %s16, 1
      %p33 = por %p31, %p32
      %p34 = scmp.ne.s32.totalorder %s26, %s29
      %p35 = scmp.eq.s32.totalorder %s16, 0
      %p36 = por %p34, %p35
      %p37 = scmp.ne.s32.totalorder %s26, %s29
      %p38 = scmp.eq.s32.totalorder %s21, 1
      %p39 = por %p37, %p38
      %p40 = scmp.ne.s32.totalorder %s29, %s30
      %p41 = scmp.eq.s32.totalorder %s21, 0
      %p42 = por %p40, %p41
      %p43 = scmp.ne.s32.totalorder %s29, %s30
      %p44 = scmp.eq.s32.totalorder %s22, 1
      %p45 = por %p43, %p44
      %p47 = scmp.ne.s32.totalorder %s30, %s46
      %p48 = scmp.eq.s32.totalorder %s22, 0
      %p49 = por %p47, %p48
      %s51 = sadd.s32 %s50, 1
      %p54 = scmp.eq.s32.totalorder %s16, 1
      %p55 = scmp.ne.s32.totalorder %s50, %s52
      %p56 = scmp.eq.s32.totalorder %s16, 0
      %p57 = por %p55, %p56
      %p58 = scmp.ne.s32.totalorder %s50, %s52
      %p59 = scmp.eq.s32.totalorder %s21, 1
      %p60 = por %p58, %p59
      %p61 = scmp.ne.s32.totalorder %s52, %s53
      %p62 = scmp.eq.s32.totalorder %s21, 0
      %p63 = por %p61, %p62
      %p64 = scmp.ne.s32.totalorder %s52, %s53
      %p65 = scmp.eq.s32.totalorder %s22, 1
      %p66 = por %p64, %p65
      %p68 = scmp.ne.s32.totalorder %s53, %s67
      %p69 = scmp.eq.s32.totalorder %s22, 0
      %p70 = por %p68, %p69
      %s72 = sadd.s32 %s71, 1
      %p75 = scmp.eq.s32.totalorder %s16, 1
      %p76 = scmp.ne.s32.totalorder %s71, %s73
      %p77 = scmp.eq.s32.totalorder %s16, 0
      %p78 = por %p76, %p77
      %p79 = scmp.ne.s32.totalorder %s71, %s73
      %p80 = scmp.eq.s32.totalorder %s21, 1
      %p81 = por %p79, %p80
      %p82 = scmp.ne.s32.totalorder %s73, %s74
      %p83 = scmp.eq.s32.totalorder %s21, 0
      %p84 = por %p82, %p83
      %p85 = scmp.ne.s32.totalorder %s73, %s74
      %p86 = scmp.eq.s32.totalorder %s22, 1
      %p87 = por %p85, %p86
      %p89 = scmp.ne.s32.totalorder %s74, %s88
      %p90 = scmp.eq.s32.totalorder %s22, 0
      %p91 = por %p89, %p90
      %s92 = ssub.s32 %s16, %s23
      %p93 = scmp.eq.s32.totalorder %s92, 0
      %s95 = sadd.s32 %s94, 1
      %s96 = scalar_select %p93, %s94, %s95
      %p99 = pneg %p93
      %p100 = scmp.eq.s32.totalorder %s16, 1
      %p101 = por %p99, %p100
      %p102 = scmp.ne.s32.totalorder %s94, %s97
      %p103 = scmp.eq.s32.totalorder %s16, 0
      %p104 = por %p102, %p103
      %p105 = scmp.ne.s32.totalorder %s94, %s97
      %p106 = scmp.eq.s32.totalorder %s21, 1
      %p107 = por %p105, %p106
      %p108 = scmp.ne.s32.totalorder %s97, %s98
      %p109 = scmp.eq.s32.totalorder %s21, 0
      %p110 = por %p108, %p109
      %p111 = scmp.ne.s32.totalorder %s97, %s98
      %p112 = scmp.eq.s32.totalorder %s22, 1
      %p113 = por %p111, %p112
      %p115 = scmp.ne.s32.totalorder %s98, %s114
      %p116 = scmp.eq.s32.totalorder %s22, 0
      %p117 = por %p115, %p116
      %p118 = scmp.le.s32.totalorder 1, %s16
      %p119 = scmp.lt.s32.totalorder %s16, 3
      %p120 = pnand %p118, %p119
      %p121 = pneg %p120
      // Predicated region
      $region9: #{tpu_custom_call.1} parent=5 // pred_check
        _
      $region10: #{tpu_custom_call.1} parent=5 // pred_check_branch
        %123 = sbr.rel (%p120) target = $region12
      $region11: #{tpu_custom_call.1} parent=5 // pred_region
        %s124 = ssub.s32 %s16, 1
        // Predicated region
        $region13: #{tpu_custom_call.1} parent=11 // pred_check
          %p125 = pneg %p63
        $region14: #{tpu_custom_call.1} parent=11 // pred_check_branch
          %127 = sbr.rel (%p125) target = $region16
        $region15: #{tpu_custom_call.1} parent=11 // pred_region
          %s129 = ssub.s32 2048, 2048
          %130 = vsyncadd [#allocation6], %s129
          %s131 = sshll.u32 [#allocation5], 4
          %s132 = int_to_ptr.vmem [resolvable:$true] %s131
          %137 = dma.hbm_to_vmem [thread:$0]  %s1, 2048, %s132, [#allocation6], 128, 128, 8
        $region16: #{tpu_custom_call.1} parent=11 // pred_fallthru
          _
        // Predicated region
        $region17: #{tpu_custom_call.1} parent=11 // pred_check
          %p138 = pneg %p84
        $region18: #{tpu_custom_call.1} parent=11 // pred_check_branch
          %140 = sbr.rel (%p138) target = $region20
        $region19: #{tpu_custom_call.1} parent=11 // pred_region
          %s142 = ssub.s32 128, 128
          %143 = vsyncadd [#allocation6], %s142
          %s145 = sshll.u32 [#allocation7], 4
          %s146 = int_to_ptr.vmem [resolvable:$true] %s145
          %148 = dma.hbm_to_vmem [thread:$0]  %s2, 128, %s146, [#allocation6]
        $region20: #{tpu_custom_call.1} parent=11 // pred_fallthru
          _
      $region12: #{tpu_custom_call.1} parent=5 // pred_fallthru
        _
      %p149 = scmp.lt.s32.totalorder %s16, 2
      // Predicated region
      $region21: #{tpu_custom_call.1} parent=5 // pred_check
        %p150 = pneg %p149
      $region22: #{tpu_custom_call.1} parent=5 // pred_check_branch
        %152 = sbr.rel (%p150) target = $region24
      $region23: #{tpu_custom_call.1} parent=5 // pred_region
        // Predicated region
        $region25: #{tpu_custom_call.1} parent=23 // pred_check
          %p153 = pneg %p36
        $region26: #{tpu_custom_call.1} parent=23 // pred_check_branch
          %155 = sbr.rel (%p153) target = $region28
        $region27: #{tpu_custom_call.1} parent=23 // pred_region
          %s156 = sand.u32 %s26, 1
          %s157 = scalar_lea.sflag [#allocation3], %s156
          %s158 = sand.u32 %s26, 1
          %s159 = smul.addr %s158, 8
          %s160 = scalar_lea.vmem [#allocation2], %s159
          %s162 = ssub.s32 128, 128
          %163 = vsyncadd %s157, %s162
          %s164 = smul.addr %s16, 128
          %s165 = scalar_lea.hbm %s0, %s164
          %s167 = sshll.u32 %s160, 4
          %s168 = int_to_ptr.vmem [resolvable:$true] %s167
          %170 = dma.hbm_to_vmem [thread:$0]  %s165, 128, %s168, %s157
        $region28: #{tpu_custom_call.1} parent=23 // pred_fallthru
          _
      $region24: #{tpu_custom_call.1} parent=5 // pred_fallthru
        _
      %p171 = scmp.le.s32.totalorder 1, %s16
      %p172 = scmp.lt.s32.totalorder %s16, 3
      %p173 = pnand %p171, %p172
      %p174 = pneg %p173
      // Predicated region
      $region29: #{tpu_custom_call.1} parent=5 // pred_check
        _
      $region30: #{tpu_custom_call.1} parent=5 // pred_check_branch
        %176 = sbr.rel (%p173) target = $region32
      $region31: #{tpu_custom_call.1} parent=5 // pred_region
        %s177 = ssub.s32 %s16, 1
        %s178 = sand.u32 %s29, 1
        %s179 = scalar_lea.sflag [#allocation3], %s178
        %s180 = sand.u32 %s29, 1
        %s181 = smul.addr %s180, 8
        %s182 = scalar_lea.vmem [#allocation2], %s181
        // Predicated region
        $region33: #{tpu_custom_call.1} parent=31 // pred_check
          %p183 = pneg %p42
        $region34: #{tpu_custom_call.1} parent=31 // pred_check_branch
          %185 = sbr.rel (%p183) target = $region36
        $region35: #{tpu_custom_call.1} parent=31 // pred_region
          %186 = dma.done %s179, 128
        $region36: #{tpu_custom_call.1} parent=31 // pred_fallthru
          _
        // Predicated region
        $region37: #{tpu_custom_call.1} parent=31 // pred_check
          %p187 = pneg %p63
        $region38: #{tpu_custom_call.1} parent=31 // pred_check_branch
          %189 = sbr.rel (%p187) target = $region40
        $region39: #{tpu_custom_call.1} parent=31 // pred_region
          %190 = dma.done [#allocation6], 2048
        $region40: #{tpu_custom_call.1} parent=31 // pred_fallthru
          _
        // Predicated region
        $region41: #{tpu_custom_call.1} parent=31 // pred_check
          %p191 = pneg %p84
        $region42: #{tpu_custom_call.1} parent=31 // pred_check_branch
          %193 = sbr.rel (%p191) target = $region44
        $region43: #{tpu_custom_call.1} parent=31 // pred_region
          %194 = dma.done [#allocation6], 128
        $region44: #{tpu_custom_call.1} parent=31 // pred_fallthru
          _
        %s195 = sand.u32 %s29, 1
        %s196 = scalar_lea.sflag [#allocation3], %s195
        %s197 = sand.u32 %s29, 1
        %s198 = smul.addr %s197, 8
        %s199 = scalar_lea.vmem [#allocation2], %s198
        %p200 = pneg %p42
        %p201 = pneg %p39
        %p202 = pneg %p63
        %p203 = pneg %p60
        %p204 = pneg %p84
        %p205 = pneg %p81
        %p206 = pneg %p110
        %p207 = pneg %p107
        %s208 = sand.u32 %s97, 1
        %s209 = scalar_lea.sflag [#allocation4], %s208
        %s210 = sand.u32 %s97, 1
        %s211 = smul.addr %s210, 8
        %s212 = scalar_lea.vmem [#allocation8], %s211
        %v213 = vld [vmem:[%s182] sm:$0xff]
        %v214 = vld [vmem:[#allocation5] sm:$0xff]
        %v215 = vld [vmem:[#allocation5 + $0x8] sm:$0xff]
        %v216 = vld [vmem:[#allocation5 + $0x10] sm:$0xff]
        %v217 = vld [vmem:[#allocation5 + $0x18] sm:$0xff]
        %v218 = vld [vmem:[#allocation5 + $0x20] sm:$0xff]
        %v219 = vld [vmem:[#allocation5 + $0x28] sm:$0xff]
        %v220 = vld [vmem:[#allocation5 + $0x30] sm:$0xff]
        %v221 = vld [vmem:[#allocation5 + $0x38] sm:$0xff]
        %v222 = vld [vmem:[#allocation5 + $0x40] sm:$0xff]
        %v223 = vld [vmem:[#allocation5 + $0x48] sm:$0xff]
        %v224 = vld [vmem:[#allocation5 + $0x50] sm:$0xff]
        %v225 = vld [vmem:[#allocation5 + $0x58] sm:$0xff]
        %v226 = vld [vmem:[#allocation5 + $0x60] sm:$0xff]
        %v227 = vld [vmem:[#allocation5 + $0x68] sm:$0xff]
        %v228 = vld [vmem:[#allocation5 + $0x70] sm:$0xff]
        %v229 = vld [vmem:[#allocation5 + $0x78] sm:$0xff]
        %v230 = vld [vmem:[#allocation7] sm:$0xff]
        %v231 = vmul.f32 %v214, %v214
        %v232 = vmul.f32 %v215, %v215
        %v233 = vmul.f32 %v216, %v216
        %v234 = vmul.f32 %v217, %v217
        %v235 = vmul.f32 %v218, %v218
        %v236 = vmul.f32 %v219, %v219
        %v237 = vmul.f32 %v220, %v220
        %v238 = vmul.f32 %v221, %v221
        %v239 = vmul.f32 %v222, %v222
        %v240 = vmul.f32 %v223, %v223
        %v241 = vmul.f32 %v224, %v224
        %v242 = vmul.f32 %v225, %v225
        %v243 = vmul.f32 %v226, %v226
        %v244 = vmul.f32 %v227, %v227
        %v245 = vmul.f32 %v228, %v228
        %v246 = vmul.f32 %v229, %v229
        %v247 = vadd.f32 %v231, %v232
        %v248 = vadd.f32 %v247, %v233
        %v249 = vadd.f32 %v248, %v234
        %v250 = vadd.f32 %v249, %v235
        %v251 = vadd.f32 %v250, %v236
        %v252 = vadd.f32 %v251, %v237
        %v253 = vadd.f32 %v252, %v238
        %v254 = vadd.f32 %v253, %v239
        %v255 = vadd.f32 %v254, %v240
        %v256 = vadd.f32 %v255, %v241
        %v257 = vadd.f32 %v256, %v242
        %v258 = vadd.f32 %v257, %v243
        %v259 = vadd.f32 %v258, %v244
        %v260 = vadd.f32 %v259, %v245
        %v261 = vadd.f32 %v260, %v246
        %v262 = vrot.slane %v261, 4
        %v263 = vadd.f32 %v261, %v262
        %v264 = vrot.slane %v263, 2
        %v265 = vadd.f32 %v263, %v264
        %v266 = vrot.slane %v265, 1
        %v267 = vadd.f32 %v265, %v266
        %v268 = vrsqrt.pop %v267
        %v269 = vmul.f32 %v230, %v268
        %270 = vmatprep.subr.mxu0 0.0
        %271 = vmatpush1.msra.mxu0 %v229
        %272 = vmatprep.subr.mxu0 0.0
        %273 = vmatpush1.msra.mxu0 %v228
        %274 = vmatprep.subr.mxu0 0.0
        %275 = vmatpush1.msra.mxu0 %v227
        %276 = vmatprep.subr.mxu0 0.0
        %277 = vmatpush1.msra.mxu0 %v226
        %278 = vmatprep.subr.mxu0 0.0
        %279 = vmatpush1.msra.mxu0 %v225
        %280 = vmatprep.subr.mxu0 0.0
        %281 = vmatpush1.msra.mxu0 %v224
        %282 = vmatprep.subr.mxu0 0.0
        %283 = vmatpush1.msra.mxu0 %v223
        %284 = vmatprep.subr.mxu0 0.0
        %285 = vmatpush1.msra.mxu0 %v222
        %286 = vmatprep.subr.mxu0 0.0
        %287 = vmatpush1.msra.mxu0 %v221
        %288 = vmatprep.subr.mxu0 0.0
        %289 = vmatpush1.msra.mxu0 %v220
        %290 = vmatprep.subr.mxu0 0.0
        %291 = vmatpush1.msra.mxu0 %v219
        %292 = vmatprep.subr.mxu0 0.0
        %293 = vmatpush1.msra.mxu0 %v218
        %294 = vmatprep.subr.mxu0 0.0
        %295 = vmatpush1.msra.mxu0 %v217
        %296 = vmatprep.subr.mxu0 0.0
        %297 = vmatpush1.msra.mxu0 %v216
        %298 = vmatprep.subr.mxu0 0.0
        %299 = vmatpush1.msra.mxu0 %v215
        %300 = vmatprep.subr.mxu0 0.0
        %301 = vmatpush1.msra.mxu0 %v214
        %302 = vmatprep.subr.mxu0 0.0
        %303 = vmatpush2.msra.mxu0 0.0
        %304 = vmatprep.subr.mxu0 0.0
        %305 = vmatpush2.msra.mxu0 0.0
        %306 = vmatprep.subr.mxu0 0.0
        %307 = vmatpush2.msra.mxu0 0.0
        %308 = vmatprep.subr.mxu0 0.0
        %309 = vmatpush2.msra.mxu0 0.0
        %310 = vmatprep.subr.mxu0 0.0
        %311 = vmatpush2.msra.mxu0 0.0
        %312 = vmatprep.subr.mxu0 0.0
        %313 = vmatpush2.msra.mxu0 0.0
        %314 = vmatprep.subr.mxu0 0.0
        %315 = vmatpush2.msra.mxu0 0.0
        %316 = vmatprep.subr.mxu0 0.0
        %317 = vmatpush2.msra.mxu0 0.0
        %318 = vmatprep.subr.mxu0 0.0
        %319 = vmatpush2.msra.mxu0 0.0
        %320 = vmatprep.subr.mxu0 0.0
        %321 = vmatpush2.msra.mxu0 0.0
        %322 = vmatprep.subr.mxu0 0.0
        %323 = vmatpush2.msra.mxu0 0.0
        %324 = vmatprep.subr.mxu0 0.0
        %325 = vmatpush2.msra.mxu0 0.0
        %326 = vmatprep.subr.mxu0 0.0
        %327 = vmatpush2.msra.mxu0 0.0
        %328 = vmatprep.subr.mxu0 0.0
        %329 = vmatpush2.msra.mxu0 0.0
        %330 = vmatprep.subr.mxu0 0.0
        %331 = vmatpush2.msra.mxu0 0.0
        %332 = vmatprep.subr.mxu0 0.0
        %333 = vmatpush2.msra.mxu0 0.0
        %334 = vmatprep.mubr.f32.mxu0 0.0
        %335 = vmatmul.mubr.f32.gmra.mxu0 %v213
        %v336 = vpop.f32.mrf.mxu0
        %v337 = vadd.f32 0.0, %v336
        %v338 = vpop.f32.mrf.mxu0
        %339 = vdwg.mxu0
        %v340 = vlaneseq
        %v341 = vshrl.u32 %v340, 7
        %v342 = vsub.s32 0, %v341
        %v343 = vrot.slane %v269, %v342
        %v344 = vmul.f32 %v337, %v343
        %v345 = vlaneseq
        %v346 = vshrl.u32 %v345, 7
        %v347 = vsub.s32 1, %v346
        %v348 = vrot.slane %v230, %v347
        %v349 = vadd.f32 %v344, %v348
        %vm350 = vcmp.gt.f32.partialorder %v349, 0.0
        %v351 = vlaneseq
        %v352 = vshrl.u32 %v351, 7
        %v353 = vsub.s32 2, %v352
        %v354 = vrot.slane %v230, %v353
        %v355 = vmul.f32 %v354, %v349
        %v356 = vsel %vm350, %v349, %v355
        %v357 = vlaneseq
        %v358 = vshrl.u32 %v357, 7
        %v359 = vsub.s32 3, %v358
        %v360 = vrot.slane %v230, %v359
        %v361 = vmul.f32 %v360, %v213
        %v362 = vlaneseq
        %v363 = vshrl.u32 %v362, 7
        %v364 = vsub.s32 4, %v363
        %v365 = vrot.slane %v230, %v364
        %v366 = vmul.f32 %v365, %v356
        %v367 = vadd.f32 %v361, %v366
        %368 = vst [vmem:[%s212] sm:$0xff] %v367
        %s369 = sand.u32 %s97, 1
        %s370 = scalar_lea.sflag [#allocation4], %s369
        %s371 = sand.u32 %s97, 1
        %s372 = smul.addr %s371, 8
        %s373 = scalar_lea.vmem [#allocation8], %s372
        // Predicated region
        $region45: #{tpu_custom_call.1} parent=31 // pred_check
          %p374 = pneg %p107
        $region46: #{tpu_custom_call.1} parent=31 // pred_check_branch
          %376 = sbr.rel (%p374) target = $region48
        $region47: #{tpu_custom_call.1} parent=31 // pred_region
          %s378 = ssub.s32 128, 128
          %379 = vsyncadd %s370, %s378
          %s380 = smul.addr %s21, 128
          %s381 = scalar_lea.hbm %s3, %s380
          %s383 = sshll.u32 %s373, 4
          %s384 = int_to_ptr.vmem [resolvable:$true] %s383
          %386 = dma.vmem_to_hbm [thread:$0]  %s384, 128, %s381, %s370
        $region48: #{tpu_custom_call.1} parent=31 // pred_fallthru
          _
      $region32: #{tpu_custom_call.1} parent=5 // pred_fallthru
        _
      %p387 = scmp.le.s32.totalorder 2, %s16
      // Predicated region
      $region49: #{tpu_custom_call.1} parent=5 // pred_check
        %p388 = pneg %p387
      $region50: #{tpu_custom_call.1} parent=5 // pred_check_branch
        %390 = sbr.rel (%p388) target = $region52
      $region51: #{tpu_custom_call.1} parent=5 // pred_region
        %s391 = ssub.s32 %s16, 2
        // Predicated region
        $region53: #{tpu_custom_call.1} parent=51 // pred_check
          %p392 = pneg %p113
        $region54: #{tpu_custom_call.1} parent=51 // pred_check_branch
          %394 = sbr.rel (%p392) target = $region56
        $region55: #{tpu_custom_call.1} parent=51 // pred_region
          %s395 = sand.u32 %s98, 1
          %s396 = scalar_lea.sflag [#allocation4], %s395
          %s397 = sand.u32 %s98, 1
          %s398 = smul.addr %s397, 8
          %s399 = scalar_lea.vmem [#allocation8], %s398
          %400 = dma.done %s396, 128
        $region56: #{tpu_custom_call.1} parent=51 // pred_fallthru
          _
      $region52: #{tpu_custom_call.1} parent=5 // pred_fallthru
        _
    $region6: #{tpu_custom_call.1} parent=1 // loop_footer
      %s20 = sadd.s32 1, %s16
    $region7: #{tpu_custom_call.1} parent=1 // loop_footer_branch
      %15 = sbr.rel target = $region3
    $region8: #{tpu_custom_call.1} parent=1 // loop_exit
      _
    %401 = vsyncpa [#allocation3], 1
    %s402 = scalar_lea.sflag [#allocation3], 1
    %403 = vsyncpa %s402, 1
    %404 = vsyncpa [#allocation6], 1
    %405 = vsyncpa [#allocation4], 1
    %s406 = scalar_lea.sflag [#allocation4], 1
    %407 = vsyncpa %s406, 1

</llo_original>
